<compile_context>
chip_gen: v5e
topology: v5e:2x2
jax: 0.10.0
libtpu: 0.0.40
codegen_flags: <defaults>
</compile_context>

<pallas_src>
import functools

import numpy as np
import jax
import jax.numpy as jnp
from jax.experimental import pallas as pl
from jax.experimental.pallas import tpu as pltpu

BN_EPS = 1e-5


# ---------------------------------------------------------------------------
# Kernel 1: adaptive-avg-pool (as matmul) + 1x1 conv with folded BatchNorm.
# Consumes x in native (B, C, HW) layout (contraction over HW via dot_general,
# i.e. a transposed MXU operand -> no host-side transpose of x) and emits a
# lane-dense, spatial-major (B, 16, 128) bf16 block.
# ---------------------------------------------------------------------------
def pool_conv_kernel(x_ref, pt_ref, wt_ref, b_ref, o_ref, *, batch):
    # x_ref : (B, C, HW)   native-layout input block
    # pt_ref: (16, HW)     P^T (adaptive-pool averaging matrix, transposed)
    # wt_ref: (C, 128)     folded conv weight, transposed (BN baked in)
    # b_ref : (1, 128)     folded bias (conv bias + BN)
    # o_ref : (B, 16, 128) bf16, o_ref[b, k, o] == conv_bn(x)[b, o, k]
    for b in range(batch):  # static unroll (small B)
        # (16, HW) x (C, HW) contracted over HW -> (16, C)
        pooled_t = jax.lax.dot_general(
            pt_ref[...], x_ref[b],
            dimension_numbers=(((1,), (1,)), ((), ())),
            preferred_element_type=jnp.float32)
        y_t = jnp.dot(pooled_t, wt_ref[...],
                      preferred_element_type=jnp.float32)             # (16, 128)
        o_ref[b] = (y_t + b_ref[...]).astype(o_ref.dtype)


# ---------------------------------------------------------------------------
# Kernel 2: MLP head  relu(x @ W1 + b1) @ W2pad + b2pad  (Dropout = identity).
# Single "parallel" batch-row grid axis; w1 is fully resident (constant
# index_map -> DMA'd once), fc2 output is a lane-dense (Bm, 128) block.
# ---------------------------------------------------------------------------
def mlp_kernel(x_ref, w1_ref, b1_ref, w2_ref, b2_ref, o_ref):
    # x_ref : (Bm, 2048) bf16    w1_ref: (2048, 1024) bf16   b1_ref: (1, 1024) f32
    # w2_ref: (1024, 128) bf16   b2_ref: (1, 128) f32        o_ref : (Bm, 128) f32
    h = jnp.dot(x_ref[...], w1_ref[...],
                preferred_element_type=jnp.float32)                   # (Bm, 1024)
    h = jnp.maximum(h + b1_ref[...], 0.0)
    o_ref[...] = jnp.dot(h.astype(w2_ref.dtype), w2_ref[...],
                         preferred_element_type=jnp.float32) + b2_ref[...]


# ---------------------------------------------------------------------------
# Host-side helpers / glue
# ---------------------------------------------------------------------------
def adaptive_pool_matrix(H, W, out_h=4, out_w=4):
    """(H*W, out_h*out_w) matrix P with x_flat @ P == adaptive_avg_pool2d."""
    P = np.zeros((H * W, out_h * out_w), np.float32)
    for ph in range(out_h):
        h0 = (ph * H) // out_h
        h1 = -((-(ph + 1) * H) // out_h)   # ceil
        for pw in range(out_w):
            w0 = (pw * W) // out_w
            w1 = -((-(pw + 1) * W) // out_w)
            cnt = (h1 - h0) * (w1 - w0)
            for h in range(h0, h1):
                for w in range(w0, w1):
                    P[h * W + w, ph * out_w + pw] = 1.0 / cnt
    return jnp.asarray(P)


def _pick_block(n, candidates):
    """Largest candidate dividing n, preferring >=2 grid steps (v7x megacore)."""
    divisors = [c for c in candidates if c <= n and n % c == 0]
    multi = [c for c in divisors if n // c >= 2]
    if multi:
        return multi[0]
    if divisors:
        return divisors[0]
    return n


def auxiliary_loss_forward(x, params):
    """x: (N, C, H, W) float32 -> logits (N, 10) float32 (eval-mode forward)."""
    N, C, H, W = x.shape
    HW = H * W

    # Pad batch to a multiple of 8 (sublane alignment; avoids a fully-unrolled
    # fallback block for awkward N).  Padded rows are sliced off at the end.
    N_pad = ((N + 7) // 8) * 8
    if N_pad != N:
        x = jnp.pad(x, ((0, N_pad - N), (0, 0), (0, 0), (0, 0)))

    # ---- fold BatchNorm (running stats) + conv bias into the conv weight ----
    scale = params["bn_gamma"] * jax.lax.rsqrt(params["bn_var"] + BN_EPS)  # (128,)
    w_t = (params["w_conv"] * scale[:, None]).T                           # (C, 128)
    b_eff = (scale * (params["b_conv"] - params["bn_mean"])
             + params["bn_beta"]).reshape(1, 128)                         # (1, 128)

    # Pool matrix, transposed so the pooled result comes out spatial-major.
    Pt = adaptive_pool_matrix(H, W).T                                     # (16, HW)
    x_n = x.reshape(N_pad, C, HW)                                         # native layout

    # ---- kernel 1: pool + conv1x1 (BN folded), blocked over the batch ------
    B = _pick_block(N_pad, (8, 4, 2, 1))
    y_t = pl.pallas_call(
        functools.partial(pool_conv_kernel, batch=B),
        out_shape=jax.ShapeDtypeStruct((N_pad, 16, 128), jnp.bfloat16),
        grid=(N_pad // B,),
        in_specs=[
            pl.BlockSpec((B, C, HW), lambda i: (i, 0, 0)),
            pl.BlockSpec((16, HW), lambda i: (0, 0)),
            pl.BlockSpec((C, 128), lambda i: (0, 0)),
            pl.BlockSpec((1, 128), lambda i: (0, 0)),
        ],
        out_specs=pl.BlockSpec((B, 16, 128), lambda i: (i, 0, 0)),
        compiler_params=pltpu.CompilerParams(
            dimension_semantics=("parallel",)),
    )(x_n, Pt, w_t, b_eff)

    # Spatial-major flatten (free metadata reshape; already bf16).  The
    # channel-major torch .view(-1, 2048) ordering is folded into fc1's weight
    # rows instead:  feat[n, k*128+o] == y[n, o, k]  and
    #   w1_perm[k*128+o, :] = w1[o*16+k, :]
    feat = y_t.reshape(N_pad, 2048)
    w1_perm = (params["w1"].reshape(128, 16, 1024)
               .transpose(1, 0, 2).reshape(2048, 1024).astype(jnp.bfloat16))
    b1 = params["b1"].reshape(1, 1024)
    # Lane-dense fc2: zero-pad the 10 output columns to 128.
    w2_pad = jnp.pad(params["w2"], ((0, 0), (0, 118))).astype(jnp.bfloat16)
    b2_pad = jnp.pad(params["b2"], (0, 118)).reshape(1, 128)

    # ---- kernel 2: fc1 + relu + fc2, resident w1, parallel batch axis ------
    Bm = _pick_block(N_pad, (256, 128, 64, 32, 16, 8))
    logits_pad = pl.pallas_call(
        mlp_kernel,
        out_shape=jax.ShapeDtypeStruct((N_pad, 128), jnp.float32),
        grid=(N_pad // Bm,),
        in_specs=[
            pl.BlockSpec((Bm, 2048), lambda i: (i, 0)),
            pl.BlockSpec((2048, 1024), lambda i: (0, 0)),   # resident (DMA'd once)
            pl.BlockSpec((1, 1024), lambda i: (0, 0)),
            pl.BlockSpec((1024, 128), lambda i: (0, 0)),
            pl.BlockSpec((1, 128), lambda i: (0, 0)),
        ],
        out_specs=pl.BlockSpec((Bm, 128), lambda i: (i, 0)),
        compiler_params=pltpu.CompilerParams(
            dimension_semantics=("parallel",),
            vmem_limit_bytes=32 * 1024 * 1024),
    )(feat, w1_perm, b1, w2_pad, b2_pad)

    return logits_pad[:N, :10]


def reference_forward(x, params):
    """Pure-JAX f32 reference with the same eval-mode semantics."""
    N, C, H, W = x.shape
    P = adaptive_pool_matrix(H, W)
    xf = x.reshape(N, C, H * W)
    hp = jax.lax.Precision.HIGHEST
    pooled = jnp.einsum("ncs,sk->nck", xf, P, precision=hp)
    y = jnp.einsum("oc,nck->nok", params["w_conv"], pooled, precision=hp)
    y = y + params["b_conv"][None, :, None]
    inv = jax.lax.rsqrt(params["bn_var"] + BN_EPS)
    y = ((y - params["bn_mean"][None, :, None])
         * (params["bn_gamma"] * inv)[None, :, None]
         + params["bn_beta"][None, :, None])
    feat = y.reshape(N, 2048)
    h = jnp.maximum(jnp.dot(feat, params["w1"], precision=hp) + params["b1"], 0.0)
    return jnp.dot(h, params["w2"], precision=hp) + params["b2"]


def init_params(key, in_channels):
    ks = jax.random.split(key, 8)
    s = 0.05
    return {
        # conv_block: Conv2d(in_channels, 128, k=1) + BatchNorm2d(128)
        "w_conv":   s * jax.random.normal(ks[0], (128, in_channels), jnp.float32),
        "b_conv":   s * jax.random.normal(ks[1], (128,), jnp.float32),
        "bn_gamma": jnp.ones((128,), jnp.float32)
                    + 0.1 * jax.random.normal(ks[2], (128,), jnp.float32),
        "bn_beta":  0.1 * jax.random.normal(ks[3], (128,), jnp.float32),
        "bn_mean":  0.1 * jax.random.normal(ks[4], (128,), jnp.float32),
        "bn_var":   jnp.abs(jax.random.normal(ks[5], (128,), jnp.float32)) + 0.5,
        # fc1: 2048 -> 1024 ; fc2: 1024 -> 10   (stored as x @ W + b convention)
        "w1": s * jax.random.normal(ks[6], (2048, 1024), jnp.float32),
        "b1": jnp.zeros((1024,), jnp.float32),
        "w2": s * jax.random.normal(ks[7], (1024, 10), jnp.float32),
        "b2": jnp.zeros((10,), jnp.float32),
    }


if __name__ == "__main__":
    # Small shapes: the module requires the conv output (128 ch) pooled to 4x4
    # so that .view(-1, 2048) works; batch / in_channels / spatial kept small.
    N, C_IN, H, W = 2, 32, 8, 8
    key = jax.random.PRNGKey(0)
    k_x, k_p = jax.random.split(key)
    x = jax.random.normal(k_x, (N, C_IN, H, W), jnp.float32)
    params = init_params(k_p, C_IN)

    out = jax.block_until_ready(auxiliary_loss_forward(x, params))
    ref = jax.block_until_ready(reference_forward(x, params))

    assert out.shape == (N, 10), out.shape
    assert bool(jnp.allclose(out, ref, rtol=5e-2, atol=5e-2)), "mismatch vs reference"
    # TODO(synk): training-mode Dropout / batch-statistics BatchNorm are not
    # implemented (eval-mode forward semantics only).
    print("KERNEL_OK")
</pallas_src>

<mosaic_0001>
module attributes {stable_mosaic.version = 11 : i64} {
  func.func @pool_conv_kernel(%arg0: i32, %arg1: memref<4x32x64xf32, #tpu.memory_space<vmem>>, %arg2: memref<16x64xf32, #tpu.memory_space<vmem>>, %arg3: memref<32x128xf32, #tpu.memory_space<vmem>>, %arg4: memref<1x128xf32, #tpu.memory_space<vmem>>, %arg5: memref<4x16x128xbf16, #tpu.memory_space<vmem>>) attributes {dimension_semantics = [#tpu.dimension_semantics<parallel>], iteration_bounds = array<i64: 2>, scalar_prefetch = 0 : i64, scratch_operands = 0 : i64, tpu.core_type = #tpu.core_type<tc>, window_params = [{transform_indices = @transform_0, window_bounds = array<i64: 4, 32, 64>}, {pipeline_mode = #tpu.pipeline_mode<synchronous>, transform_indices = @transform_1, window_bounds = array<i64: 16, 64>}, {pipeline_mode = #tpu.pipeline_mode<synchronous>, transform_indices = @transform_2, window_bounds = array<i64: 32, 128>}, {pipeline_mode = #tpu.pipeline_mode<synchronous>, transform_indices = @transform_3, window_bounds = array<i64: 1, 128>}, {transform_indices = @transform_4, window_bounds = array<i64: 4, 16, 128>}]} {
    %c0 = arith.constant 0 : index
    %c0_0 = arith.constant 0 : index
    %0 = vector.load %arg2[%c0, %c0_0] : memref<16x64xf32, #tpu.memory_space<vmem>>, vector<16x64xf32>
    %c0_1 = arith.constant 0 : index
    %c0_2 = arith.constant 0 : index
    %c0_3 = arith.constant 0 : index
    %1 = vector.load %arg1[%c0_1, %c0_2, %c0_3] : memref<4x32x64xf32, #tpu.memory_space<vmem>>, vector<1x32x64xf32>
    %2 = vector.shape_cast %1 : vector<1x32x64xf32> to vector<32x64xf32>
    %cst = arith.constant dense<0.000000e+00> : vector<16x32xf32>
    %3 = tpu.matmul %0, %2, %cst {dimension_numbers = #tpu.dot_dimension_numbers<[1], [1], [0], [0], [0, 0, 1, 0], [], []>} : vector<16x64xf32>, vector<32x64xf32>, vector<16x32xf32> -> vector<16x32xf32>
    %c0_4 = arith.constant 0 : index
    %c0_5 = arith.constant 0 : index
    %4 = vector.load %arg3[%c0_4, %c0_5] : memref<32x128xf32, #tpu.memory_space<vmem>>, vector<32x128xf32>
    %cst_6 = arith.constant dense<0.000000e+00> : vector<16x128xf32>
    %5 = tpu.matmul %3, %4, %cst_6 {dimension_numbers = #tpu.dot_dimension_numbers<[1], [0], [0], [1], [0, 0, 1, 1], [], []>} : vector<16x32xf32>, vector<32x128xf32>, vector<16x128xf32> -> vector<16x128xf32>
    %c0_7 = arith.constant 0 : index
    %c0_8 = arith.constant 0 : index
    %6 = vector.load %arg4[%c0_7, %c0_8] : memref<1x128xf32, #tpu.memory_space<vmem>>, vector<1x128xf32>
    %7 = vector.broadcast %6 : vector<1x128xf32> to vector<16x128xf32>
    %8 = arith.addf %5, %7 : vector<16x128xf32>
    %9 = arith.truncf %8 : vector<16x128xf32> to vector<16x128xbf16>
    %c0_9 = arith.constant 0 : index
    %c0_10 = arith.constant 0 : index
    %c0_11 = arith.constant 0 : index
    %10 = vector.load %arg5[%c0_9, %c0_10, %c0_11] : memref<4x16x128xbf16, #tpu.memory_space<vmem>>, vector<1x16x128xbf16>
    %11 = vector.shape_cast %10 : vector<1x16x128xbf16> to vector<16x128xbf16>
    %12 = vector.shape_cast %9 : vector<16x128xbf16> to vector<1x16x128xbf16>
    tpu.vector_store %arg5[%c0_9, %c0_10, %c0_11], %12 {strides = array<i32>} : memref<4x16x128xbf16, #tpu.memory_space<vmem>>, vector<1x16x128xbf16>,
    %c0_12 = arith.constant 0 : index
    %c0_13 = arith.constant 0 : index
    %13 = vector.load %arg2[%c0_12, %c0_13] : memref<16x64xf32, #tpu.memory_space<vmem>>, vector<16x64xf32>
    %c1 = arith.constant 1 : index
    %c0_14 = arith.constant 0 : index
    %c0_15 = arith.constant 0 : index
    %14 = vector.load %arg1[%c1, %c0_14, %c0_15] : memref<4x32x64xf32, #tpu.memory_space<vmem>>, vector<1x32x64xf32>
    %15 = vector.shape_cast %14 : vector<1x32x64xf32> to vector<32x64xf32>
    %cst_16 = arith.constant dense<0.000000e+00> : vector<16x32xf32>
    %16 = tpu.matmul %13, %15, %cst_16 {dimension_numbers = #tpu.dot_dimension_numbers<[1], [1], [0], [0], [0, 0, 1, 0], [], []>} : vector<16x64xf32>, vector<32x64xf32>, vector<16x32xf32> -> vector<16x32xf32>
    %c0_17 = arith.constant 0 : index
    %c0_18 = arith.constant 0 : index
    %17 = vector.load %arg3[%c0_17, %c0_18] : memref<32x128xf32, #tpu.memory_space<vmem>>, vector<32x128xf32>
    %cst_19 = arith.constant dense<0.000000e+00> : vector<16x128xf32>
    %18 = tpu.matmul %16, %17, %cst_19 {dimension_numbers = #tpu.dot_dimension_numbers<[1], [0], [0], [1], [0, 0, 1, 1], [], []>} : vector<16x32xf32>, vector<32x128xf32>, vector<16x128xf32> -> vector<16x128xf32>
    %c0_20 = arith.constant 0 : index
    %c0_21 = arith.constant 0 : index
    %19 = vector.load %arg4[%c0_20, %c0_21] : memref<1x128xf32, #tpu.memory_space<vmem>>, vector<1x128xf32>
    %20 = vector.broadcast %19 : vector<1x128xf32> to vector<16x128xf32>
    %21 = arith.addf %18, %20 : vector<16x128xf32>
    %22 = arith.truncf %21 : vector<16x128xf32> to vector<16x128xbf16>
    %c1_22 = arith.constant 1 : index
    %c0_23 = arith.constant 0 : index
    %c0_24 = arith.constant 0 : index
    %23 = vector.load %arg5[%c1_22, %c0_23, %c0_24] : memref<4x16x128xbf16, #tpu.memory_space<vmem>>, vector<1x16x128xbf16>
    %24 = vector.shape_cast %23 : vector<1x16x128xbf16> to vector<16x128xbf16>
    %25 = vector.shape_cast %22 : vector<16x128xbf16> to vector<1x16x128xbf16>
    tpu.vector_store %arg5[%c1_22, %c0_23, %c0_24], %25 {strides = array<i32>} : memref<4x16x128xbf16, #tpu.memory_space<vmem>>, vector<1x16x128xbf16>,
    %c0_25 = arith.constant 0 : index
    %c0_26 = arith.constant 0 : index
    %26 = vector.load %arg2[%c0_25, %c0_26] : memref<16x64xf32, #tpu.memory_space<vmem>>, vector<16x64xf32>
    %c2 = arith.constant 2 : index
    %c0_27 = arith.constant 0 : index
    %c0_28 = arith.constant 0 : index
    %27 = vector.load %arg1[%c2, %c0_27, %c0_28] : memref<4x32x64xf32, #tpu.memory_space<vmem>>, vector<1x32x64xf32>
    %28 = vector.shape_cast %27 : vector<1x32x64xf32> to vector<32x64xf32>
    %cst_29 = arith.constant dense<0.000000e+00> : vector<16x32xf32>
    %29 = tpu.matmul %26, %28, %cst_29 {dimension_numbers = #tpu.dot_dimension_numbers<[1], [1], [0], [0], [0, 0, 1, 0], [], []>} : vector<16x64xf32>, vector<32x64xf32>, vector<16x32xf32> -> vector<16x32xf32>
    %c0_30 = arith.constant 0 : index
    %c0_31 = arith.constant 0 : index
    %30 = vector.load %arg3[%c0_30, %c0_31] : memref<32x128xf32, #tpu.memory_space<vmem>>, vector<32x128xf32>
    %cst_32 = arith.constant dense<0.000000e+00> : vector<16x128xf32>
    %31 = tpu.matmul %29, %30, %cst_32 {dimension_numbers = #tpu.dot_dimension_numbers<[1], [0], [0], [1], [0, 0, 1, 1], [], []>} : vector<16x32xf32>, vector<32x128xf32>, vector<16x128xf32> -> vector<16x128xf32>
    %c0_33 = arith.constant 0 : index
    %c0_34 = arith.constant 0 : index
    %32 = vector.load %arg4[%c0_33, %c0_34] : memref<1x128xf32, #tpu.memory_space<vmem>>, vector<1x128xf32>
    %33 = vector.broadcast %32 : vector<1x128xf32> to vector<16x128xf32>
    %34 = arith.addf %31, %33 : vector<16x128xf32>
    %35 = arith.truncf %34 : vector<16x128xf32> to vector<16x128xbf16>
    %c2_35 = arith.constant 2 : index
    %c0_36 = arith.constant 0 : index
    %c0_37 = arith.constant 0 : index
    %36 = vector.load %arg5[%c2_35, %c0_36, %c0_37] : memref<4x16x128xbf16, #tpu.memory_space<vmem>>, vector<1x16x128xbf16>
    %37 = vector.shape_cast %36 : vector<1x16x128xbf16> to vector<16x128xbf16>
    %38 = vector.shape_cast %35 : vector<16x128xbf16> to vector<1x16x128xbf16>
    tpu.vector_store %arg5[%c2_35, %c0_36, %c0_37], %38 {strides = array<i32>} : memref<4x16x128xbf16, #tpu.memory_space<vmem>>, vector<1x16x128xbf16>,
    %c0_38 = arith.constant 0 : index
    %c0_39 = arith.constant 0 : index
    %39 = vector.load %arg2[%c0_38, %c0_39] : memref<16x64xf32, #tpu.memory_space<vmem>>, vector<16x64xf32>
    %c3 = arith.constant 3 : index
    %c0_40 = arith.constant 0 : index
    %c0_41 = arith.constant 0 : index
    %40 = vector.load %arg1[%c3, %c0_40, %c0_41] : memref<4x32x64xf32, #tpu.memory_space<vmem>>, vector<1x32x64xf32>
    %41 = vector.shape_cast %40 : vector<1x32x64xf32> to vector<32x64xf32>
    %cst_42 = arith.constant dense<0.000000e+00> : vector<16x32xf32>
    %42 = tpu.matmul %39, %41, %cst_42 {dimension_numbers = #tpu.dot_dimension_numbers<[1], [1], [0], [0], [0, 0, 1, 0], [], []>} : vector<16x64xf32>, vector<32x64xf32>, vector<16x32xf32> -> vector<16x32xf32>
    %c0_43 = arith.constant 0 : index
    %c0_44 = arith.constant 0 : index
    %43 = vector.load %arg3[%c0_43, %c0_44] : memref<32x128xf32, #tpu.memory_space<vmem>>, vector<32x128xf32>
    %cst_45 = arith.constant dense<0.000000e+00> : vector<16x128xf32>
    %44 = tpu.matmul %42, %43, %cst_45 {dimension_numbers = #tpu.dot_dimension_numbers<[1], [0], [0], [1], [0, 0, 1, 1], [], []>} : vector<16x32xf32>, vector<32x128xf32>, vector<16x128xf32> -> vector<16x128xf32>
    %c0_46 = arith.constant 0 : index
    %c0_47 = arith.constant 0 : index
    %45 = vector.load %arg4[%c0_46, %c0_47] : memref<1x128xf32, #tpu.memory_space<vmem>>, vector<1x128xf32>
    %46 = vector.broadcast %45 : vector<1x128xf32> to vector<16x128xf32>
    %47 = arith.addf %44, %46 : vector<16x128xf32>
    %48 = arith.truncf %47 : vector<16x128xf32> to vector<16x128xbf16>
    %c3_48 = arith.constant 3 : index
    %c0_49 = arith.constant 0 : index
    %c0_50 = arith.constant 0 : index
    %49 = vector.load %arg5[%c3_48, %c0_49, %c0_50] : memref<4x16x128xbf16, #tpu.memory_space<vmem>>, vector<1x16x128xbf16>
    %50 = vector.shape_cast %49 : vector<1x16x128xbf16> to vector<16x128xbf16>
    %51 = vector.shape_cast %48 : vector<16x128xbf16> to vector<1x16x128xbf16>
    tpu.vector_store %arg5[%c3_48, %c0_49, %c0_50], %51 {strides = array<i32>} : memref<4x16x128xbf16, #tpu.memory_space<vmem>>, vector<1x16x128xbf16>,
    return
  }
  func.func @transform_0(%arg0: i32) -> (i32, i32, i32) {
    %c0_i32 = arith.constant 0 : i32
    %c0_i32_0 = arith.constant 0 : i32
    %c0_i32_1 = arith.constant 0 : i32
    return %arg0, %c0_i32, %c0_i32_0 : i32, i32, i32
  }
  func.func @transform_1(%arg0: i32) -> (i32, i32) {
    %c0_i32 = arith.constant 0 : i32
    %c0_i32_0 = arith.constant 0 : i32
    %c0_i32_1 = arith.constant 0 : i32
    return %c0_i32, %c0_i32_0 : i32, i32
  }
  func.func @transform_2(%arg0: i32) -> (i32, i32) {
    %c0_i32 = arith.constant 0 : i32
    %c0_i32_0 = arith.constant 0 : i32
    %c0_i32_1 = arith.constant 0 : i32
    return %c0_i32, %c0_i32_0 : i32, i32
  }
  func.func @transform_3(%arg0: i32) -> (i32, i32) {
    %c0_i32 = arith.constant 0 : i32
    %c0_i32_0 = arith.constant 0 : i32
    %c0_i32_1 = arith.constant 0 : i32
    return %c0_i32, %c0_i32_0 : i32, i32
  }
  func.func @transform_4(%arg0: i32) -> (i32, i32, i32) {
    %c0_i32 = arith.constant 0 : i32
    %c0_i32_0 = arith.constant 0 : i32
    %c0_i32_1 = arith.constant 0 : i32
    return %arg0, %c0_i32, %c0_i32_0 : i32, i32, i32
  }
}

</mosaic_0001>

<llo_original>
// kernel: tpu_custom_call.1
$region0: #{tpu_custom_call.1}
  #allocation0 [shape = 'u32[]', space=smem, size = 0x4, offset = 0x4, fixed_abs, tag = 'smem constant byte address 0x4 - core index']
  #allocation1 [shape = 'u32[72,128]{1,0:T(1,128)}', space=vmem, size = 0x9000, scoped, tag = 'internal scratch']
  %s0 = inlined_call_operand.hbm [shape: f32[8,32,64], index: 0, kind: input, shape index: {}]
  %s1 = inlined_call_operand.hbm [shape: f32[16,64], index: 1, kind: input, shape index: {}]
  %s2 = inlined_call_operand.hbm [shape: f32[32,128], index: 2, kind: input, shape index: {}]
  %s3 = inlined_call_operand.vmem [shape: f32[1,128], index: 3, kind: input, shape index: {}]
  %s4 = inlined_call_operand.hbm [shape: bf16[8,16,128], index: 4, kind: output, shape index: {}]
  %s5 = sld [smem:[#allocation0]]
  $region61: #{tpu_custom_call.1} parent=0
    _
  %s7 = ssub.s32 1, %s5
  %s8 = scalar_select 0, %s7, %s5
  $region1: #{tpu_custom_call.1} parent=0
    #allocation2 [shape = 'u8[131072]{0}', space=vmem, size = 0x20000, scoped, tag = 'input window, operand 0']
    #allocation3 [shape = 's32[2]{0}', space=sflag, size = 0x8, scoped, tag = 'scoped memory for tpu_custom_call.1']
    #allocation4 [shape = 's32[2]{0}', space=sflag, size = 0x8, scoped, tag = 'scoped memory for tpu_custom_call.1']
    #allocation5 [shape = 'u8[8192]{0}', space=vmem, size = 0x2000, scoped, tag = 'input window, operand 1, single buffered']
    #allocation6 [shape = 's32[1]{0}', space=sflag, size = 0x4, scoped, tag = 'scoped memory for tpu_custom_call.1']
    #allocation7 [shape = 'u8[16384]{0}', space=vmem, size = 0x4000, scoped, tag = 'input window, operand 2, single buffered']
    #allocation8 [shape = 'u8[32768]{0}', space=vmem, size = 0x8000, scoped, tag = 'output window, operand 0']
    %9 = vsyncpa [#allocation3], 0
    %s10 = scalar_lea.sflag [#allocation3], 1
    %11 = vsyncpa %s10, 0
    %12 = vsyncpa [#allocation6], 0
    %13 = vsyncpa [#allocation4], 0
    %s14 = scalar_lea.sflag [#allocation4], 1
    %15 = vsyncpa %s14, 0
    loop: start=0, step=1, limit=4
    $region2: #{tpu_custom_call.1} parent=1 // loop_pre_header
      _
    $region3: #{tpu_custom_call.1} parent=1 // loop_header
      %s17 = sphi 0, %s21
      %p18 = scmp.ge.s32.totalorder %s17, 4
      %s27 = sphi 0, %s29
      %s30 = sphi 0, %s27
      %s31 = sphi 0, %s30
      %s47 = sphi 0, %s31
      %s51 = sphi 0, %s51
      %s53 = sphi 0, %s51
      %s54 = sphi 0, %s53
      %s68 = sphi 0, %s54
      %s72 = sphi 0, %s72
      %s74 = sphi 0, %s72
      %s75 = sphi 0, %s74
      %s89 = sphi 0, %s75
      %s93 = sphi 0, %s93
      %s95 = sphi 0, %s93
      %s96 = sphi 0, %s95
      %s110 = sphi 0, %s96
      %s116 = sphi 0, %s118
      %s119 = sphi 0, %s116
      %s120 = sphi 0, %s119
      %s136 = sphi 0, %s120
    $region4: #{tpu_custom_call.1} parent=1 // loop_header_branch
      %20 = sbr.rel (%p18) target = $region8
    $region5: #{tpu_custom_call.1} parent=1 // loop_body
      %s22 = ssub.s32 %s17, 1
      %s23 = ssub.s32 %s17, 2
      %s24 = sadd.s32 %s17, 1
      %s25 = ssub.s32 %s17, %s24
      %p26 = scmp.eq.s32.totalorder %s25, 0
      %s28 = sadd.s32 %s27, 1
      %s29 = scalar_select %p26, %s27, %s28
      %p32 = pneg %p26
      %p33 = scmp.eq.s32.totalorder %s17, 1
      %p34 = por %p32, %p33
      %p35 = scmp.ne.s32.totalorder %s27, %s30
      %p36 = scmp.eq.s32.totalorder %s17, 0
      %p37 = por %p35, %p36
      %p38 = scmp.ne.s32.totalorder %s27, %s30
      %p39 = scmp.eq.s32.totalorder %s22, 1
      %p40 = por %p38, %p39
      %p41 = scmp.ne.s32.totalorder %s30, %s31
      %p42 = scmp.eq.s32.totalorder %s22, 0
      %p43 = por %p41, %p42
      %p44 = scmp.ne.s32.totalorder %s30, %s31
      %p45 = scmp.eq.s32.totalorder %s23, 1
      %p46 = por %p44, %p45
      %p48 = scmp.ne.s32.totalorder %s31, %s47
      %p49 = scmp.eq.s32.totalorder %s23, 0
      %p50 = por %p48, %p49
      %s52 = sadd.s32 %s51, 1
      %p55 = scmp.eq.s32.totalorder %s17, 1
      %p56 = scmp.ne.s32.totalorder %s51, %s53
      %p57 = scmp.eq.s32.totalorder %s17, 0
      %p58 = por %p56, %p57
      %p59 = scmp.ne.s32.totalorder %s51, %s53
      %p60 = scmp.eq.s32.totalorder %s22, 1
      %p61 = por %p59, %p60
      %p62 = scmp.ne.s32.totalorder %s53, %s54
      %p63 = scmp.eq.s32.totalorder %s22, 0
      %p64 = por %p62, %p63
      %p65 = scmp.ne.s32.totalorder %s53, %s54
      %p66 = scmp.eq.s32.totalorder %s23, 1
      %p67 = por %p65, %p66
      %p69 = scmp.ne.s32.totalorder %s54, %s68
      %p70 = scmp.eq.s32.totalorder %s23, 0
      %p71 = por %p69, %p70
      %s73 = sadd.s32 %s72, 1
      %p76 = scmp.eq.s32.totalorder %s17, 1
      %p77 = scmp.ne.s32.totalorder %s72, %s74
      %p78 = scmp.eq.s32.totalorder %s17, 0
      %p79 = por %p77, %p78
      %p80 = scmp.ne.s32.totalorder %s72, %s74
      %p81 = scmp.eq.s32.totalorder %s22, 1
      %p82 = por %p80, %p81
      %p83 = scmp.ne.s32.totalorder %s74, %s75
      %p84 = scmp.eq.s32.totalorder %s22, 0
      %p85 = por %p83, %p84
      %p86 = scmp.ne.s32.totalorder %s74, %s75
      %p87 = scmp.eq.s32.totalorder %s23, 1
      %p88 = por %p86, %p87
      %p90 = scmp.ne.s32.totalorder %s75, %s89
      %p91 = scmp.eq.s32.totalorder %s23, 0
      %p92 = por %p90, %p91
      %s94 = sadd.s32 %s93, 1
      %p97 = scmp.eq.s32.totalorder %s17, 1
      %p98 = scmp.ne.s32.totalorder %s93, %s95
      %p99 = scmp.eq.s32.totalorder %s17, 0
      %p100 = por %p98, %p99
      %p101 = scmp.ne.s32.totalorder %s93, %s95
      %p102 = scmp.eq.s32.totalorder %s22, 1
      %p103 = por %p101, %p102
      %p104 = scmp.ne.s32.totalorder %s95, %s96
      %p105 = scmp.eq.s32.totalorder %s22, 0
      %p106 = por %p104, %p105
      %p107 = scmp.ne.s32.totalorder %s95, %s96
      %p108 = scmp.eq.s32.totalorder %s23, 1
      %p109 = por %p107, %p108
      %p111 = scmp.ne.s32.totalorder %s96, %s110
      %p112 = scmp.eq.s32.totalorder %s23, 0
      %p113 = por %p111, %p112
      %s114 = ssub.s32 %s17, %s24
      %p115 = scmp.eq.s32.totalorder %s114, 0
      %s117 = sadd.s32 %s116, 1
      %s118 = scalar_select %p115, %s116, %s117
      %p121 = pneg %p115
      %p122 = scmp.eq.s32.totalorder %s17, 1
      %p123 = por %p121, %p122
      %p124 = scmp.ne.s32.totalorder %s116, %s119
      %p125 = scmp.eq.s32.totalorder %s17, 0
      %p126 = por %p124, %p125
      %p127 = scmp.ne.s32.totalorder %s116, %s119
      %p128 = scmp.eq.s32.totalorder %s22, 1
      %p129 = por %p127, %p128
      %p130 = scmp.ne.s32.totalorder %s119, %s120
      %p131 = scmp.eq.s32.totalorder %s22, 0
      %p132 = por %p130, %p131
      %p133 = scmp.ne.s32.totalorder %s119, %s120
      %p134 = scmp.eq.s32.totalorder %s23, 1
      %p135 = por %p133, %p134
      %p137 = scmp.ne.s32.totalorder %s120, %s136
      %p138 = scmp.eq.s32.totalorder %s23, 0
      %p139 = por %p137, %p138
      %p140 = scmp.le.s32.totalorder 1, %s17
      %p141 = scmp.lt.s32.totalorder %s17, 3
      %p142 = pnand %p140, %p141
      %p143 = pneg %p142
      // Predicated region
      $region9: #{tpu_custom_call.1} parent=5 // pred_check
        _
      $region10: #{tpu_custom_call.1} parent=5 // pred_check_branch
        %145 = sbr.rel (%p142) target = $region12
      $region11: #{tpu_custom_call.1} parent=5 // pred_region
        %s146 = ssub.s32 %s17, 1
        // Predicated region
        $region13: #{tpu_custom_call.1} parent=11 // pred_check
          %p147 = pneg %p64
        $region14: #{tpu_custom_call.1} parent=11 // pred_check_branch
          %149 = sbr.rel (%p147) target = $region16
        $region15: #{tpu_custom_call.1} parent=11 // pred_region
          %151 = vsyncadd [#allocation6], 0
          %s152 = sshll.u32 %s1, 4
          %s153 = int_to_ptr.hbm [resolvable:$true] %s152
          %s154 = sshll.u32 [#allocation5], 4
          %s155 = int_to_ptr.vmem [resolvable:$true] %s154
          %160 = dma.hbm_to_vmem [thread:$0]  %s153, 256, %s155, [#allocation6], 128, 128, 8
        $region16: #{tpu_custom_call.1} parent=11 // pred_fallthru
          _
        // Predicated region
        $region17: #{tpu_custom_call.1} parent=11 // pred_check
          %p161 = pneg %p85
        $region18: #{tpu_custom_call.1} parent=11 // pred_check_branch
          %163 = sbr.rel (%p161) target = $region20
        $region19: #{tpu_custom_call.1} parent=11 // pred_region
          %165 = vsyncadd [#allocation6], 0
          %s166 = sshll.u32 %s2, 4
          %s167 = int_to_ptr.hbm [resolvable:$true] %s166
          %s168 = sshll.u32 [#allocation7], 4
          %s169 = int_to_ptr.vmem [resolvable:$true] %s168
          %174 = dma.hbm_to_vmem [thread:$0]  %s167, 512, %s169, [#allocation6], 128, 128, 8
        $region20: #{tpu_custom_call.1} parent=11 // pred_fallthru
          _
        // Predicated region
        $region21: #{tpu_custom_call.1} parent=11 // pred_check
          %p175 = pneg %p106
        $region22: #{tpu_custom_call.1} parent=11 // pred_check_branch
          %177 = sbr.rel (%p175) target = $region24
        $region23: #{tpu_custom_call.1} parent=11 // pred_region
          _
        $region24: #{tpu_custom_call.1} parent=11 // pred_fallthru
          _
      $region12: #{tpu_custom_call.1} parent=5 // pred_fallthru
        _
      %p178 = scmp.lt.s32.totalorder %s17, 2
      // Predicated region
      $region25: #{tpu_custom_call.1} parent=5 // pred_check
        %p179 = pneg %p178
      $region26: #{tpu_custom_call.1} parent=5 // pred_check_branch
        %181 = sbr.rel (%p179) target = $region28
      $region27: #{tpu_custom_call.1} parent=5 // pred_region
        // Predicated region
        $region29: #{tpu_custom_call.1} parent=27 // pred_check
          %p182 = pneg %p37
        $region30: #{tpu_custom_call.1} parent=27 // pred_check_branch
          %184 = sbr.rel (%p182) target = $region32
        $region31: #{tpu_custom_call.1} parent=27 // pred_region
          %s185 = sand.u32 %s27, 1
          %s186 = scalar_lea.sflag [#allocation3], %s185
          %s187 = sand.u32 %s27, 1
          %s188 = smul.addr %s187, 128
          %s189 = scalar_lea.vmem [#allocation2], %s188
          %s190 = smul.u32 4, %s17
          %192 = vsyncadd %s186, 0
          %s193 = smul.addr %s190, 4
          %s194 = smul.addr %s193, 8
          %s195 = scalar_lea.hbm %s0, %s194
          %s196 = sshll.u32 %s195, 4
          %s197 = int_to_ptr.hbm [resolvable:$true] %s196
          %s198 = sshll.u32 %s189, 4
          %s199 = int_to_ptr.vmem [resolvable:$true] %s198
          %204 = dma.hbm_to_vmem [thread:$0]  %s197, 2048, %s199, %s186, 128, 128, 8
        $region32: #{tpu_custom_call.1} parent=27 // pred_fallthru
          _
      $region28: #{tpu_custom_call.1} parent=5 // pred_fallthru
        _
      %p205 = scmp.le.s32.totalorder 1, %s17
      %p206 = scmp.lt.s32.totalorder %s17, 3
      %p207 = pnand %p205, %p206
      %p208 = pneg %p207
      // Predicated region
      $region33: #{tpu_custom_call.1} parent=5 // pred_check
        _
      $region34: #{tpu_custom_call.1} parent=5 // pred_check_branch
        %210 = sbr.rel (%p207) target = $region36
      $region35: #{tpu_custom_call.1} parent=5 // pred_region
        %s211 = ssub.s32 %s17, 1
        %s212 = sand.u32 %s30, 1
        %s213 = scalar_lea.sflag [#allocation3], %s212
        %s214 = sand.u32 %s30, 1
        %s215 = smul.addr %s214, 128
        %s216 = scalar_lea.vmem [#allocation2], %s215
        // Predicated region
        $region37: #{tpu_custom_call.1} parent=35 // pred_check
          %p217 = pneg %p43
        $region38: #{tpu_custom_call.1} parent=35 // pred_check_branch
          %219 = sbr.rel (%p217) target = $region40
        $region39: #{tpu_custom_call.1} parent=35 // pred_region
          %221 = dma.done %s213, 2048
        $region40: #{tpu_custom_call.1} parent=35 // pred_fallthru
          _
        // Predicated region
        $region41: #{tpu_custom_call.1} parent=35 // pred_check
          %p222 = pneg %p64
        $region42: #{tpu_custom_call.1} parent=35 // pred_check_branch
          %224 = sbr.rel (%p222) target = $region44
        $region43: #{tpu_custom_call.1} parent=35 // pred_region
          %226 = dma.done [#allocation6], 256
        $region44: #{tpu_custom_call.1} parent=35 // pred_fallthru
          _
        // Predicated region
        $region45: #{tpu_custom_call.1} parent=35 // pred_check
          %p227 = pneg %p85
        $region46: #{tpu_custom_call.1} parent=35 // pred_check_branch
          %229 = sbr.rel (%p227) target = $region48
        $region47: #{tpu_custom_call.1} parent=35 // pred_region
          %231 = dma.done [#allocation6], 512
        $region48: #{tpu_custom_call.1} parent=35 // pred_fallthru
          _
        %s232 = sand.u32 %s30, 1
        %s233 = scalar_lea.sflag [#allocation3], %s232
        %s234 = sand.u32 %s30, 1
        %s235 = smul.addr %s234, 128
        %s236 = scalar_lea.vmem [#allocation2], %s235
        %p237 = pneg %p43
        %p238 = pneg %p40
        %p239 = pneg %p64
        %p240 = pneg %p61
        %p241 = pneg %p85
        %p242 = pneg %p82
        %p243 = pneg %p106
        %p244 = pneg %p103
        %p245 = pneg %p132
        %p246 = pneg %p129
        %s247 = sand.u32 %s119, 1
        %s248 = scalar_lea.sflag [#allocation4], %s247
        %s249 = sand.u32 %s119, 1
        %s250 = smul.addr %s249, 32
        %s251 = scalar_lea.vmem [#allocation8], %s250
        %s252 = smul.u32 4, %s22
        %s253 = smul.u32 4, %s22
        %v254 = vld [vmem:[#allocation5] sm:$0xff]
        %v255 = vld [vmem:[#allocation5 + $0x8] sm:$0xff]
        %v256 = vld [vmem:[%s216] sm:$0xff]
        %v257 = vld [vmem:[%s216 + $0x8] sm:$0xff]
        %v258 = vld [vmem:[%s216 + $0x10] sm:$0xff]
        %v259 = vld [vmem:[%s216 + $0x18] sm:$0xff]
        %vm260 = vcmask 523264
        %v262 = vsel %vm260, %v254, 0
        %v265 = vsel %vm260, %v255, 0
        %v268 = vsel %vm260, %v256, 0
        %v271 = vsel %vm260, %v257, 0
        %v274 = vsel %vm260, %v258, 0
        %v277 = vsel %vm260, %v259, 0
        %279 = vmatpush.xpose.msra.mxu0 0.0
        %280 = vmatpush.xpose.msra.mxu0 0.0
        %281 = vmatpush.xpose.msra.mxu0 0.0
        %282 = vmatpush.xpose.msra.mxu0 0.0
        %283 = vmatpush.xpose.msra.mxu0 0.0
        %284 = vmatpush.xpose.msra.mxu0 0.0
        %285 = vmatpush.xpose.msra.mxu0 0.0
        %286 = vmatpush.xpose.msra.mxu0 0.0
        %287 = vmatpush.xpose.msra.mxu0 0.0
        %288 = vmatpush.xpose.msra.mxu0 0.0
        %289 = vmatpush.xpose.msra.mxu0 0.0
        %290 = vmatpush.xpose.msra.mxu0 0.0
        %291 = vmatpush.xpose.msra.mxu0 %v277
        %292 = vmatpush.xpose.msra.mxu0 %v274
        %293 = vmatpush.xpose.msra.mxu0 %v271
        %294 = vmatpush.xpose.msra.mxu0 %v268
        %295 = vmatmul.f32.gmra.mxu0 %v262
        %v296 = vpop.f32.mrf.mxu0
        %v297 = vadd.f32 0.0, %v296
        %298 = vmatmul.f32.gmra.mxu0 %v265
        %v299 = vpop.f32.mrf.mxu0
        %v300 = vadd.f32 0.0, %v299
        %301 = vdwg.mxu0
        %v302 = vld [vmem:[#allocation7] sm:$0xff]
        %v303 = vld [vmem:[#allocation7 + $0x8] sm:$0xff]
        %v304 = vld [vmem:[#allocation7 + $0x10] sm:$0xff]
        %v305 = vld [vmem:[#allocation7 + $0x18] sm:$0xff]
        %v306 = vld [vmem:[%s3] sm:$0x1]
        %v308 = vperm.slane %v306, 0
        %vm310 = vcmask 261120
        %v312 = vsel %vm310, %v297, 0
        %v315 = vsel %vm310, %v300, 0
        %317 = vmatpush.msra.mxu0 0.0
        %318 = vmatpush.msra.mxu0 0.0
        %319 = vmatpush.msra.mxu0 0.0
        %320 = vmatpush.msra.mxu0 0.0
        %321 = vmatpush.msra.mxu0 0.0
        %322 = vmatpush.msra.mxu0 0.0
        %323 = vmatpush.msra.mxu0 0.0
        %324 = vmatpush.msra.mxu0 0.0
        %325 = vmatpush.msra.mxu0 0.0
        %326 = vmatpush.msra.mxu0 0.0
        %327 = vmatpush.msra.mxu0 0.0
        %328 = vmatpush.msra.mxu0 0.0
        %329 = vmatpush.msra.mxu0 %v305
        %330 = vmatpush.msra.mxu0 %v304
        %331 = vmatpush.msra.mxu0 %v303
        %332 = vmatpush.msra.mxu0 %v302
        %333 = vmatmul.f32.gmra.mxu0 %v312
        %v334 = vpop.f32.mrf.mxu0
        %v335 = vadd.f32 %v308, %v334
        %336 = vmatmul.f32.gmra.mxu0 %v315
        %v337 = vpop.f32.mrf.mxu0
        %v338 = vadd.f32 %v308, %v337
        %339 = vdwg.mxu0
        %v340 = vpack.c.bf16 %v335, %v335
        %v341 = vpack.c.bf16 %v338, %v338
        %342 = vst [vmem:[%s251] sm:$0xf] %v340
        %343 = vst [vmem:[%s251 + $0x4] sm:$0xf] %v341
        %v344 = vld [vmem:[#allocation5] sm:$0xff]
        %v345 = vld [vmem:[#allocation5 + $0x8] sm:$0xff]
        %s346 = scalar_lea.vmem %s216, 32 [#allocation2]
        %v347 = vld [vmem:[%s346] sm:$0xff]
        %v348 = vld [vmem:[%s346 + $0x8] sm:$0xff]
        %v349 = vld [vmem:[%s346 + $0x10] sm:$0xff]
        %v350 = vld [vmem:[%s346 + $0x18] sm:$0xff]
        %v352 = vsel %vm260, %v344, 0
        %v355 = vsel %vm260, %v345, 0
        %v358 = vsel %vm260, %v347, 0
        %v361 = vsel %vm260, %v348, 0
        %v364 = vsel %vm260, %v349, 0
        %v367 = vsel %vm260, %v350, 0
        %369 = vmatpush.xpose.msra.mxu0 0.0
        %370 = vmatpush.xpose.msra.mxu0 0.0
        %371 = vmatpush.xpose.msra.mxu0 0.0
        %372 = vmatpush.xpose.msra.mxu0 0.0
        %373 = vmatpush.xpose.msra.mxu0 0.0
        %374 = vmatpush.xpose.msra.mxu0 0.0
        %375 = vmatpush.xpose.msra.mxu0 0.0
        %376 = vmatpush.xpose.msra.mxu0 0.0
        %377 = vmatpush.xpose.msra.mxu0 0.0
        %378 = vmatpush.xpose.msra.mxu0 0.0
        %379 = vmatpush.xpose.msra.mxu0 0.0
        %380 = vmatpush.xpose.msra.mxu0 0.0
        %381 = vmatpush.xpose.msra.mxu0 %v367
        %382 = vmatpush.xpose.msra.mxu0 %v364
        %383 = vmatpush.xpose.msra.mxu0 %v361
        %384 = vmatpush.xpose.msra.mxu0 %v358
        %385 = vmatmul.f32.gmra.mxu0 %v352
        %v386 = vpop.f32.mrf.mxu0
        %v387 = vadd.f32 0.0, %v386
        %388 = vmatmul.f32.gmra.mxu0 %v355
        %v389 = vpop.f32.mrf.mxu0
        %v390 = vadd.f32 0.0, %v389
        %391 = vdwg.mxu0
        %v392 = vld [vmem:[#allocation7] sm:$0xff]
        %v393 = vld [vmem:[#allocation7 + $0x8] sm:$0xff]
        %v394 = vld [vmem:[#allocation7 + $0x10] sm:$0xff]
        %v395 = vld [vmem:[#allocation7 + $0x18] sm:$0xff]
        %v396 = vld [vmem:[%s3] sm:$0x1]
        %v398 = vperm.slane %v396, 0
        %v401 = vsel %vm310, %v387, 0
        %v404 = vsel %vm310, %v390, 0
        %406 = vmatpush.msra.mxu0 0.0
        %407 = vmatpush.msra.mxu0 0.0
        %408 = vmatpush.msra.mxu0 0.0
        %409 = vmatpush.msra.mxu0 0.0
        %410 = vmatpush.msra.mxu0 0.0
        %411 = vmatpush.msra.mxu0 0.0
        %412 = vmatpush.msra.mxu0 0.0
        %413 = vmatpush.msra.mxu0 0.0
        %414 = vmatpush.msra.mxu0 0.0
        %415 = vmatpush.msra.mxu0 0.0
        %416 = vmatpush.msra.mxu0 0.0
        %417 = vmatpush.msra.mxu0 0.0
        %418 = vmatpush.msra.mxu0 %v395
        %419 = vmatpush.msra.mxu0 %v394
        %420 = vmatpush.msra.mxu0 %v393
        %421 = vmatpush.msra.mxu0 %v392
        %422 = vmatmul.f32.gmra.mxu0 %v401
        %v423 = vpop.f32.mrf.mxu0
        %v424 = vadd.f32 %v398, %v423
        %425 = vmatmul.f32.gmra.mxu0 %v404
        %v426 = vpop.f32.mrf.mxu0
        %v427 = vadd.f32 %v398, %v426
        %428 = vdwg.mxu0
        %v429 = vpack.c.bf16 %v424, %v424
        %v430 = vpack.c.bf16 %v427, %v427
        %s431 = scalar_lea.vmem %s251, 8 [#allocation8]
        %432 = vst [vmem:[%s431] sm:$0xf] %v429
        %433 = vst [vmem:[%s431 + $0x4] sm:$0xf] %v430
        %v434 = vld [vmem:[#allocation5] sm:$0xff]
        %v435 = vld [vmem:[#allocation5 + $0x8] sm:$0xff]
        %s436 = scalar_lea.vmem %s216, 64 [#allocation2]
        %v437 = vld [vmem:[%s436] sm:$0xff]
        %v438 = vld [vmem:[%s436 + $0x8] sm:$0xff]
        %v439 = vld [vmem:[%s436 + $0x10] sm:$0xff]
        %v440 = vld [vmem:[%s436 + $0x18] sm:$0xff]
        %v442 = vsel %vm260, %v434, 0
        %v445 = vsel %vm260, %v435, 0
        %v448 = vsel %vm260, %v437, 0
        %v451 = vsel %vm260, %v438, 0
        %v454 = vsel %vm260, %v439, 0
        %v457 = vsel %vm260, %v440, 0
        %459 = vmatpush.xpose.msra.mxu0 0.0
        %460 = vmatpush.xpose.msra.mxu0 0.0
        %461 = vmatpush.xpose.msra.mxu0 0.0
        %462 = vmatpush.xpose.msra.mxu0 0.0
        %463 = vmatpush.xpose.msra.mxu0 0.0
        %464 = vmatpush.xpose.msra.mxu0 0.0
        %465 = vmatpush.xpose.msra.mxu0 0.0
        %466 = vmatpush.xpose.msra.mxu0 0.0
        %467 = vmatpush.xpose.msra.mxu0 0.0
        %468 = vmatpush.xpose.msra.mxu0 0.0
        %469 = vmatpush.xpose.msra.mxu0 0.0
        %470 = vmatpush.xpose.msra.mxu0 0.0
        %471 = vmatpush.xpose.msra.mxu0 %v457
        %472 = vmatpush.xpose.msra.mxu0 %v454
        %473 = vmatpush.xpose.msra.mxu0 %v451
        %474 = vmatpush.xpose.msra.mxu0 %v448
        %475 = vmatmul.f32.gmra.mxu0 %v442
        %v476 = vpop.f32.mrf.mxu0
        %v477 = vadd.f32 0.0, %v476
        %478 = vmatmul.f32.gmra.mxu0 %v445
        %v479 = vpop.f32.mrf.mxu0
        %v480 = vadd.f32 0.0, %v479
        %481 = vdwg.mxu0
        %v482 = vld [vmem:[#allocation7] sm:$0xff]
        %v483 = vld [vmem:[#allocation7 + $0x8] sm:$0xff]
        %v484 = vld [vmem:[#allocation7 + $0x10] sm:$0xff]
        %v485 = vld [vmem:[#allocation7 + $0x18] sm:$0xff]
        %v486 = vld [vmem:[%s3] sm:$0x1]
        %v488 = vperm.slane %v486, 0
        %v491 = vsel %vm310, %v477, 0
        %v494 = vsel %vm310, %v480, 0
        %496 = vmatpush.msra.mxu0 0.0
        %497 = vmatpush.msra.mxu0 0.0
        %498 = vmatpush.msra.mxu0 0.0
        %499 = vmatpush.msra.mxu0 0.0
        %500 = vmatpush.msra.mxu0 0.0
        %501 = vmatpush.msra.mxu0 0.0
        %502 = vmatpush.msra.mxu0 0.0
        %503 = vmatpush.msra.mxu0 0.0
        %504 = vmatpush.msra.mxu0 0.0
        %505 = vmatpush.msra.mxu0 0.0
        %506 = vmatpush.msra.mxu0 0.0
        %507 = vmatpush.msra.mxu0 0.0
        %508 = vmatpush.msra.mxu0 %v485
        %509 = vmatpush.msra.mxu0 %v484
        %510 = vmatpush.msra.mxu0 %v483
        %511 = vmatpush.msra.mxu0 %v482
        %512 = vmatmul.f32.gmra.mxu0 %v491
        %v513 = vpop.f32.mrf.mxu0
        %v514 = vadd.f32 %v488, %v513
        %515 = vmatmul.f32.gmra.mxu0 %v494
        %v516 = vpop.f32.mrf.mxu0
        %v517 = vadd.f32 %v488, %v516
        %518 = vdwg.mxu0
        %v519 = vpack.c.bf16 %v514, %v514
        %v520 = vpack.c.bf16 %v517, %v517
        %s521 = scalar_lea.vmem %s251, 16 [#allocation8]
        %522 = vst [vmem:[%s521] sm:$0xf] %v519
        %523 = vst [vmem:[%s521 + $0x4] sm:$0xf] %v520
        %v524 = vld [vmem:[#allocation5] sm:$0xff]
        %v525 = vld [vmem:[#allocation5 + $0x8] sm:$0xff]
        %s526 = scalar_lea.vmem %s216, 96 [#allocation2]
        %v527 = vld [vmem:[%s526] sm:$0xff]
        %v528 = vld [vmem:[%s526 + $0x8] sm:$0xff]
        %v529 = vld [vmem:[%s526 + $0x10] sm:$0xff]
        %v530 = vld [vmem:[%s526 + $0x18] sm:$0xff]
        %v532 = vsel %vm260, %v524, 0
        %v535 = vsel %vm260, %v525, 0
        %v538 = vsel %vm260, %v527, 0
        %v541 = vsel %vm260, %v528, 0
        %v544 = vsel %vm260, %v529, 0
        %v547 = vsel %vm260, %v530, 0
        %549 = vmatpush.xpose.msra.mxu0 0.0
        %550 = vmatpush.xpose.msra.mxu0 0.0
        %551 = vmatpush.xpose.msra.mxu0 0.0
        %552 = vmatpush.xpose.msra.mxu0 0.0
        %553 = vmatpush.xpose.msra.mxu0 0.0
        %554 = vmatpush.xpose.msra.mxu0 0.0
        %555 = vmatpush.xpose.msra.mxu0 0.0
        %556 = vmatpush.xpose.msra.mxu0 0.0
        %557 = vmatpush.xpose.msra.mxu0 0.0
        %558 = vmatpush.xpose.msra.mxu0 0.0
        %559 = vmatpush.xpose.msra.mxu0 0.0
        %560 = vmatpush.xpose.msra.mxu0 0.0
        %561 = vmatpush.xpose.msra.mxu0 %v547
        %562 = vmatpush.xpose.msra.mxu0 %v544
        %563 = vmatpush.xpose.msra.mxu0 %v541
        %564 = vmatpush.xpose.msra.mxu0 %v538
        %565 = vmatmul.f32.gmra.mxu0 %v532
        %v566 = vpop.f32.mrf.mxu0
        %v567 = vadd.f32 0.0, %v566
        %568 = vmatmul.f32.gmra.mxu0 %v535
        %v569 = vpop.f32.mrf.mxu0
        %v570 = vadd.f32 0.0, %v569
        %571 = vdwg.mxu0
        %v572 = vld [vmem:[#allocation7] sm:$0xff]
        %v573 = vld [vmem:[#allocation7 + $0x8] sm:$0xff]
        %v574 = vld [vmem:[#allocation7 + $0x10] sm:$0xff]
        %v575 = vld [vmem:[#allocation7 + $0x18] sm:$0xff]
        %v576 = vld [vmem:[%s3] sm:$0x1]
        %v578 = vperm.slane %v576, 0
        %v581 = vsel %vm310, %v567, 0
        %v584 = vsel %vm310, %v570, 0
        %586 = vmatpush.msra.mxu0 0.0
        %587 = vmatpush.msra.mxu0 0.0
        %588 = vmatpush.msra.mxu0 0.0
        %589 = vmatpush.msra.mxu0 0.0
        %590 = vmatpush.msra.mxu0 0.0
        %591 = vmatpush.msra.mxu0 0.0
        %592 = vmatpush.msra.mxu0 0.0
        %593 = vmatpush.msra.mxu0 0.0
        %594 = vmatpush.msra.mxu0 0.0
        %595 = vmatpush.msra.mxu0 0.0
        %596 = vmatpush.msra.mxu0 0.0
        %597 = vmatpush.msra.mxu0 0.0
        %598 = vmatpush.msra.mxu0 %v575
        %599 = vmatpush.msra.mxu0 %v574
        %600 = vmatpush.msra.mxu0 %v573
        %601 = vmatpush.msra.mxu0 %v572
        %602 = vmatmul.f32.gmra.mxu0 %v581
        %v603 = vpop.f32.mrf.mxu0
        %v604 = vadd.f32 %v578, %v603
        %605 = vmatmul.f32.gmra.mxu0 %v584
        %v606 = vpop.f32.mrf.mxu0
        %v607 = vadd.f32 %v578, %v606
        %608 = vdwg.mxu0
        %v609 = vpack.c.bf16 %v604, %v604
        %v610 = vpack.c.bf16 %v607, %v607
        %s611 = scalar_lea.vmem %s251, 24 [#allocation8]
        %612 = vst [vmem:[%s611] sm:$0xf] %v609
        %613 = vst [vmem:[%s611 + $0x4] sm:$0xf] %v610
        %s614 = sand.u32 %s119, 1
        %s615 = scalar_lea.sflag [#allocation4], %s614
        %s616 = sand.u32 %s119, 1
        %s617 = smul.addr %s616, 32
        %s618 = scalar_lea.vmem [#allocation8], %s617
        // Predicated region
        $region49: #{tpu_custom_call.1} parent=35 // pred_check
          %p619 = pneg %p129
        $region50: #{tpu_custom_call.1} parent=35 // pred_check_branch
          %621 = sbr.rel (%p619) target = $region52
        $region51: #{tpu_custom_call.1} parent=35 // pred_region
          %s622 = smul.u32 4, %s22
          %624 = vsyncadd %s615, 0
          %s625 = smul.addr %s622, 2
          %s626 = smul.addr %s625, 4
          %s627 = scalar_lea.hbm %s4, %s626
          %s628 = sshll.u32 %s618, 4
          %s629 = int_to_ptr.vmem [resolvable:$true] %s628
          %s630 = sshll.u32 %s627, 4
          %s631 = int_to_ptr.hbm [resolvable:$true] %s630
          %636 = dma.vmem_to_hbm [thread:$0]  %s629, 512, %s631, %s615, 64, 64, 4
        $region52: #{tpu_custom_call.1} parent=35 // pred_fallthru
          _
      $region36: #{tpu_custom_call.1} parent=5 // pred_fallthru
        _
      %p637 = scmp.le.s32.totalorder 2, %s17
      // Predicated region
      $region53: #{tpu_custom_call.1} parent=5 // pred_check
        %p638 = pneg %p637
      $region54: #{tpu_custom_call.1} parent=5 // pred_check_branch
        %640 = sbr.rel (%p638) target = $region56
      $region55: #{tpu_custom_call.1} parent=5 // pred_region
        %s641 = ssub.s32 %s17, 2
        // Predicated region
        $region57: #{tpu_custom_call.1} parent=55 // pred_check
          %p642 = pneg %p135
        $region58: #{tpu_custom_call.1} parent=55 // pred_check_branch
          %644 = sbr.rel (%p642) target = $region60
        $region59: #{tpu_custom_call.1} parent=55 // pred_region
          %s645 = sand.u32 %s120, 1
          %s646 = scalar_lea.sflag [#allocation4], %s645
          %s647 = sand.u32 %s120, 1
          %s648 = smul.addr %s647, 32
          %s649 = scalar_lea.vmem [#allocation8], %s648
          %651 = dma.done %s646, 512
        $region60: #{tpu_custom_call.1} parent=55 // pred_fallthru
          _
      $region56: #{tpu_custom_call.1} parent=5 // pred_fallthru
        _
    $region6: #{tpu_custom_call.1} parent=1 // loop_footer
      %s21 = sadd.s32 1, %s17
    $region7: #{tpu_custom_call.1} parent=1 // loop_footer_branch
      %16 = sbr.rel target = $region3
    $region8: #{tpu_custom_call.1} parent=1 // loop_exit
      _
    %652 = vsyncpa [#allocation3], 1
    %s653 = scalar_lea.sflag [#allocation3], 1
    %654 = vsyncpa %s653, 1
    %655 = vsyncpa [#allocation6], 1
    %656 = vsyncpa [#allocation4], 1
    %s657 = scalar_lea.sflag [#allocation4], 1
    %658 = vsyncpa %s657, 1

</llo_original>
